<compile_context>
chip_gen: v6e
topology: v6e:2x2x1
jax: 0.10.0
libtpu: 0.0.40
codegen_flags: <defaults>
</compile_context>

<pallas_src>
import functools

import jax
import jax.numpy as jnp
from jax.experimental import pallas as pl
from jax.experimental.pallas import tpu as pltpu

_TARGET_TILE_BYTES = 4 * 1024 * 1024   # ~4 MiB row tiles (amortize per-step cost)
_MIN_PALLAS_BYTES = 1 * 1024 * 1024    # below this, fused XLA multiply wins
_LANE_CHOICES = (1024, 512, 256, 128)  # lane-dense widths (multiples of 128)


def _scale_kernel(scale_ref, x_ref, o_ref):
    # scale_ref: (1,) f32 scalar in SMEM; x_ref/o_ref: (tm, lanes) VMEM tiles.
    s = scale_ref[0]
    o_ref[...] = (x_ref[...].astype(jnp.float32) * s).astype(o_ref.dtype)


def _sublane_multiple(dtype) -> int:
    # f32 -> 8, bf16/f16 -> 16, int8/fp8 -> 32 (sub-32-bit packs along sublanes).
    itemsize = jnp.dtype(dtype).itemsize
    if itemsize >= 4:
        return 8
    if itemsize == 2:
        return 16
    return 32


def _round_up(a: int, b: int) -> int:
    return ((a + b - 1) // b) * b


@functools.lru_cache(maxsize=None)
def _vmem_limit_bytes() -> int:
    """Scoped-VMEM limit: room for 4 double-buffered ~4 MiB tiles on every
    generation, capped at half the physical VMEM reported by the runtime."""
    phys = 64 * 1024 * 1024  # most conservative physical VMEM (v7x per-TC)
    try:
        info = pltpu.get_tpu_info()
        phys = int(getattr(info, "vmem_capacity_bytes", phys) or phys)
    except Exception:
        pass
    return min(32 * 1024 * 1024, phys // 2)


def _reference_scale(x: jax.Array, scale: jax.Array) -> jax.Array:
    """Plain fused XLA multiply (f32 math, activation-dtype result)."""
    s = scale.astype(jnp.float32).reshape(())
    return (x.astype(jnp.float32) * s).astype(x.dtype)


def scale_layer(x: jax.Array, scale: jax.Array, *,
                donate: bool = False, force_pallas: bool = False) -> jax.Array:
    """Pallas equivalent of ScaleLayer.forward(x) = x * scale.

    x:            any-rank float array (e.g. NCHW activations).
    scale:        shape-(1,) float parameter (multiply done in f32).
    donate:       if True, alias the activation input to the output
                  (caller should donate x, e.g. via jit donate_argnums).
    force_pallas: bypass the small-size fused-XLA fallback.
    """
    orig_shape = x.shape
    orig_dtype = x.dtype
    n = x.size
    if n == 0:
        return x

    itemsize = jnp.dtype(orig_dtype).itemsize
    nbytes = n * itemsize

    # Small-size fallback: a pallas_call here is pure fixed overhead and blocks
    # XLA from fusing the scalar multiply into neighboring ops.
    if not force_pallas and nbytes < _MIN_PALLAS_BYTES:
        return _reference_scale(x, scale)

    vmem_limit = _vmem_limit_bytes()

    # ---- build a copy-free 2-D view ------------------------------------------
    lanes = next((l for l in _LANE_CHOICES if n % l == 0), None)
    if lanes is not None:
        x2d = x.reshape(-1, lanes)                      # free bitcast reshape
    else:
        # Misaligned total size: stream the natural 2-D collapse.  The ragged
        # last row tile is masked by Pallas's partial-block handling; stores
        # may be lane-masked if the last dim isn't a multiple of 128, but
        # there is no pad/slice HBM round trip.
        if x.ndim >= 2:
            x2d = x.reshape(-1, orig_shape[-1])
        else:
            x2d = x.reshape(1, -1)
        lanes = x2d.shape[1]

    m = x2d.shape[0]
    sub = _sublane_multiple(orig_dtype)

    # The minimum legal tile (in + out, double-buffered) must fit scoped VMEM.
    min_tile_bytes = min(m, sub) * lanes * itemsize
    if 4 * min_tile_bytes > (vmem_limit * 3) // 4:
        # Degenerate shape (e.g. huge prime-length last dim); the fused XLA
        # multiply is already at the HBM roofline for this op.
        return _reference_scale(x, scale)

    # ---- row tiling ------------------------------------------------------------
    target_rows = max(sub, (_TARGET_TILE_BYTES // (lanes * itemsize)) // sub * sub)
    if m > sub:
        # Always produce >= 2 row tiles when possible so v7x can shard the
        # "parallel" grid axis over its 2 TensorCores.
        tm = min(target_rows, _round_up(pl.cdiv(m, 2), sub))
    else:
        tm = m                                           # single full-slab tile
    grid = (pl.cdiv(m, tm),)

    extra = {}
    if donate:
        # Activation input (index 1) aliases the output: in-place scaling for
        # donated buffers; no second n-byte HBM allocation.
        extra["input_output_aliases"] = {1: 0}

    out2d = pl.pallas_call(
        _scale_kernel,
        out_shape=jax.ShapeDtypeStruct((m, lanes), orig_dtype),
        grid=grid,
        in_specs=[
            pl.BlockSpec(memory_space=pltpu.SMEM),        # f32 scalar parameter
            pl.BlockSpec((tm, lanes), lambda i: (i, 0)),  # pipelined input tiles
        ],
        out_specs=pl.BlockSpec((tm, lanes), lambda i: (i, 0)),
        compiler_params=pltpu.CompilerParams(
            dimension_semantics=("parallel",),            # shard tile loop on v7x
            vmem_limit_bytes=vmem_limit,                  # 4 MiB tiles legal on v5e too
        ),
        cost_estimate=pl.CostEstimate(
            flops=n,
            transcendentals=0,
            bytes_accessed=2 * n * itemsize,              # read + write, pure BW op
        ),
        **extra,
    )(scale.astype(jnp.float32).reshape(1), x2d)

    return out2d.reshape(orig_shape)


if __name__ == "__main__":
    key = jax.random.PRNGKey(0)
    # NCHW activations, small shapes (as in the module's typical use).
    x = jax.random.normal(key, (2, 4, 16, 16), dtype=jnp.float32)

    # Deterministic parameter init, matching nn.Parameter(FloatTensor([0.001])).
    init_value = 0.001
    scale = jnp.array([init_value], dtype=jnp.float32)
    ref = _reference_scale(x, scale)

    # Force the Pallas path (the auto heuristic would route a tiny activation
    # to the fused-XLA fallback).
    out = jax.block_until_ready(scale_layer(x, scale, force_pallas=True))
    assert out.shape == x.shape
    assert out.dtype == x.dtype
    assert jnp.allclose(out, ref, atol=1e-6, rtol=1e-6)

    # Misaligned total size (not a multiple of 128): ragged-tail path, no pad.
    x_odd = jax.random.normal(jax.random.PRNGKey(1), (3, 5, 7, 9), dtype=jnp.float32)
    out_odd = jax.block_until_ready(scale_layer(x_odd, scale, force_pallas=True))
    assert jnp.allclose(out_odd, x_odd * scale[0], atol=1e-6, rtol=1e-6)

    # bf16 activations: multiply in f32 (like PyTorch's f32 parameter), result
    # stored in the activation dtype.
    x_bf16 = x.astype(jnp.bfloat16)
    out_bf16 = jax.block_until_ready(scale_layer(x_bf16, scale, force_pallas=True))
    ref_bf16 = (x_bf16.astype(jnp.float32) * scale[0]).astype(jnp.bfloat16)
    assert out_bf16.dtype == jnp.bfloat16
    assert jnp.allclose(out_bf16.astype(jnp.float32),
                        ref_bf16.astype(jnp.float32), atol=1e-3, rtol=1e-2)

    # Donated / in-place variant (input_output_aliases) under jit donation.
    donated_fn = jax.jit(
        lambda a, s: scale_layer(a, s, donate=True, force_pallas=True),
        donate_argnums=(0,))
    out_donated = jax.block_until_ready(donated_fn(x + 0.0, scale))
    assert jnp.allclose(out_donated, ref, atol=1e-6, rtol=1e-6)

    # Auto small-size fallback path (plain fused XLA multiply).
    out_small = jax.block_until_ready(scale_layer(x, scale))
    assert jnp.allclose(out_small, ref, atol=1e-6, rtol=1e-6)

    print("KERNEL_OK")
</pallas_src>

<mosaic_0001>
module attributes {stable_mosaic.version = 11 : i64} {
  func.func @_scale_kernel(%arg0: i32, %arg1: memref<1xf32, #tpu.memory_space<smem>>, %arg2: memref<2x1024xf32, #tpu.memory_space<vmem>>, %arg3: memref<2x1024xf32, #tpu.memory_space<vmem>>) attributes {dimension_semantics = [#tpu.dimension_semantics<parallel>], iteration_bounds = array<i64: 1>, scalar_prefetch = 0 : i64, scratch_operands = 0 : i64, tpu.core_type = #tpu.core_type<tc>, window_params = [{transform_indices = @transform_0, window_bounds = array<i64: 1>}, {transform_indices = @transform_1, window_bounds = array<i64: 2, 1024>}, {transform_indices = @transform_2, window_bounds = array<i64: 2, 1024>}]} {
    %c0 = arith.constant 0 : index
    %0 = memref.load %arg1[%c0] : memref<1xf32, #tpu.memory_space<smem>>
    %c0_0 = arith.constant 0 : index
    %c0_1 = arith.constant 0 : index
    %1 = vector.load %arg2[%c0_0, %c0_1] : memref<2x1024xf32, #tpu.memory_space<vmem>>, vector<2x1024xf32>
    %2 = vector.broadcast %0 : f32 to vector<2x1024xf32>
    %3 = arith.mulf %1, %2 : vector<2x1024xf32>
    %c0_2 = arith.constant 0 : index
    %c0_3 = arith.constant 0 : index
    %4 = vector.load %arg3[%c0_2, %c0_3] : memref<2x1024xf32, #tpu.memory_space<vmem>>, vector<2x1024xf32>
    tpu.vector_store %arg3[%c0_2, %c0_3], %3 {strides = array<i32>} : memref<2x1024xf32, #tpu.memory_space<vmem>>, vector<2x1024xf32>,
    return
  }
  func.func @transform_0(%arg0: i32) -> i32 {
    %c0_i32 = arith.constant 0 : i32
    %c0_i32_0 = arith.constant 0 : i32
    return %c0_i32 : i32
  }
  func.func @transform_1(%arg0: i32) -> (i32, i32) {
    %c0_i32 = arith.constant 0 : i32
    %c0_i32_0 = arith.constant 0 : i32
    return %arg0, %c0_i32 : i32, i32
  }
  func.func @transform_2(%arg0: i32) -> (i32, i32) {
    %c0_i32 = arith.constant 0 : i32
    %c0_i32_0 = arith.constant 0 : i32
    return %arg0, %c0_i32 : i32, i32
  }
}

</mosaic_0001>

<llo_original>
// kernel: tpu_custom_call.1
$region0: #{tpu_custom_call.1}
  #allocation0 [shape = 'u32[]', space=smem, size = 0x4, offset = 0x4, fixed_abs, tag = 'smem constant byte address 0x4 - core index']
  #allocation1 [shape = 'u32[144,128]{1,0:T(1,128)}', space=vmem, size = 0x12000, scoped, tag = 'internal scratch']
  #allocation2 [shape = 'f32[1]{0:T(128)S(6)}', space=smem, size = 0x200, scoped, tag = 'scoped memory for tpu_custom_call.1']
  %s0 = inlined_call_operand.<no memory space> [shape: f32[1], index: 0, kind: input, shape index: {}]
  %s1 = inlined_call_operand.hbm [shape: f32[2,1024], index: 1, kind: input, shape index: {}]
  %s2 = inlined_call_operand.hbm [shape: f32[2,1024], index: 2, kind: output, shape index: {}]
  %s3 = sld [smem:[#allocation0]]
  $region22: #{tpu_custom_call.1} parent=0
    _
  %s5 = ssub.s32 1, %s3
  %s6 = scalar_select 0, %s5, %s3
  %7 = sst [smem:[#allocation2]] %s0
  $region1: #{tpu_custom_call.1} parent=0
    #allocation3 [shape = 'u8[8192]{0}', space=vmem, size = 0x2000, scoped, tag = 'input window, operand 1, single buffered']
    #allocation4 [shape = 's32[1]{0}', space=sflag, size = 0x4, scoped, tag = 'scoped memory for tpu_custom_call.1']
    #allocation5 [shape = 's32[1]{0}', space=sflag, size = 0x4, scoped, tag = 'scoped memory for tpu_custom_call.1']
    #allocation6 [shape = 'u8[8192]{0}', space=vmem, size = 0x2000, scoped, tag = 'output window, operand 0, single buffered']
    %8 = vsyncpa [#allocation4], 0
    %9 = vsyncpa [#allocation5], 0
    // Predicated region
    $region2: #{tpu_custom_call.1} parent=1 // pred_check
      _
    $region3: #{tpu_custom_call.1} parent=1 // pred_check_branch
      %11 = sbr.rel (0) target = $region5
    $region4: #{tpu_custom_call.1} parent=1 // pred_region
      _
    $region5: #{tpu_custom_call.1} parent=1 // pred_fallthru
      _
    // Predicated region
    $region6: #{tpu_custom_call.1} parent=1 // pred_check
      _
    $region7: #{tpu_custom_call.1} parent=1 // pred_check_branch
      %13 = sbr.rel (0) target = $region9
    $region8: #{tpu_custom_call.1} parent=1 // pred_region
      %s15 = ssub.s32 256, 256
      %16 = vsyncadd [#allocation4], %s15
      %s18 = sshll.u32 [#allocation3], 4
      %s19 = int_to_ptr.vmem [resolvable:$true] %s18
      %21 = dma.hbm_to_vmem [thread:$0]  %s1, 256, %s19, [#allocation4]
    $region9: #{tpu_custom_call.1} parent=1 // pred_fallthru
      _
    // Predicated region
    $region10: #{tpu_custom_call.1} parent=1 // pred_check
      _
    $region11: #{tpu_custom_call.1} parent=1 // pred_check_branch
      %23 = sbr.rel (0) target = $region13
    $region12: #{tpu_custom_call.1} parent=1 // pred_region
      %24 = dma.done [#allocation4], 256
    $region13: #{tpu_custom_call.1} parent=1 // pred_fallthru
      _
    %s25 = sld [smem:[#allocation2]]
    %v26 = vld [vmem:[#allocation3] sm:$0xff]
    %v27 = vld [vmem:[#allocation3 + $0x8] sm:$0xff]
    %v28 = vstv %s25
    %v29 = vmul.f32 %v26, %v28
    %v30 = vmul.f32 %v27, %v28
    %31 = vst [vmem:[#allocation6] sm:$0xff] %v29
    %32 = vst [vmem:[#allocation6 + $0x8] sm:$0xff] %v30
    // Predicated region
    $region14: #{tpu_custom_call.1} parent=1 // pred_check
      _
    $region15: #{tpu_custom_call.1} parent=1 // pred_check_branch
      %34 = sbr.rel (0) target = $region17
    $region16: #{tpu_custom_call.1} parent=1 // pred_region
      %s36 = ssub.s32 256, 256
      %37 = vsyncadd [#allocation5], %s36
      %s39 = sshll.u32 [#allocation6], 4
      %s40 = int_to_ptr.vmem [resolvable:$true] %s39
      %42 = dma.vmem_to_hbm [thread:$0]  %s40, 256, %s2, [#allocation5]
    $region17: #{tpu_custom_call.1} parent=1 // pred_fallthru
      _
    // Predicated region
    $region18: #{tpu_custom_call.1} parent=1 // pred_check
      _
    $region19: #{tpu_custom_call.1} parent=1 // pred_check_branch
      %44 = sbr.rel (0) target = $region21
    $region20: #{tpu_custom_call.1} parent=1 // pred_region
      %45 = dma.done [#allocation5], 256
    $region21: #{tpu_custom_call.1} parent=1 // pred_fallthru
      _
    %46 = vsyncpa [#allocation4], 1
    %47 = vsyncpa [#allocation5], 1

</llo_original>
